<compile_context>
chip_gen: v7x
topology: tpu7x:2x2x1
jax: 0.10.0
libtpu: 0.0.40
codegen_flags: <defaults>
</compile_context>

<pallas_src>
import jax
import jax.numpy as jnp
from jax.experimental import pallas as pl
from jax.experimental.pallas import tpu as pltpu


def _align8(x):
    return ((x + 7) // 8) * 8


def _gcn_generator_kernel(adj_bd_ref, deg_ref, params_ref, z_ref, out_ref):
    """adj_bd:[bt*N, bt*N], deg:[N,1], params:[32+, max(F,C)],
    z:[1,bt,F], out:[1,bt,N,C]."""
    n_feat = z_ref.shape[-1]
    n_classes = out_ref.shape[-1]
    bt = z_ref.shape[1]
    n_nodes = out_ref.shape[2]

    # Sublane-aligned static views into the packed parameter slab.
    b1_off = _align8(n_feat)
    w2_off = b1_off + 8
    b2_off = w2_off + _align8(n_feat)
    w1 = params_ref[0:n_feat, 0:n_feat]                      # [F, F]
    b1 = params_ref[b1_off:b1_off + 1, 0:n_feat]             # [1, F]
    w2 = params_ref[w2_off:w2_off + n_feat, 0:n_classes]     # [F, C]
    b2 = params_ref[b2_off:b2_off + 1, 0:n_classes]          # [1, C]

    deg = deg_ref[...]                                       # [N, 1] (precomputed)
    z2 = z_ref[0]                                            # [bt, F]

    # Layer 1 (exact rewrite): adj @ repeat(z_b) @ W1 = rowsum(adj) ⊗ (z_b @ W1)
    r = jnp.dot(z2, w1, preferred_element_type=jnp.float32)  # [bt, F]
    h = jnp.maximum(deg[None, :, :] * r[:, None, :] + b1[None, :, :], 0.0)
    h2 = h.reshape(bt * n_nodes, n_feat)                     # [bt*N, F]

    # Layer 2: one matmul for all samples via block-diagonal adjacency.
    p = jnp.dot(h2, w2, preferred_element_type=jnp.float32)            # [bt*N, C]
    s = jnp.dot(adj_bd_ref[...], p, preferred_element_type=jnp.float32) + b2

    # log_softmax over classes, computed once for the whole [bt*N, C] block.
    m = jnp.max(s, axis=-1, keepdims=True)
    sh = s - m
    lse = jnp.log(jnp.sum(jnp.exp(sh), axis=-1, keepdims=True))
    out_ref[0] = (sh - lse).reshape(bt, n_nodes, n_classes).astype(out_ref.dtype)


def _num_grid_blocks(batch):
    """1 grid step per TensorCore: 2 on v7x, 1 on single-TC chips."""
    try:
        kind = jax.devices()[0].device_kind.lower()
    except Exception:
        kind = ""
    n_tc = 2 if "v7" in kind else 1
    if n_tc > 1 and batch % n_tc == 0:
        return n_tc
    return 1


def gcn_generator_forward(adj, z_batch, w1, b1, w2, b2, *, batch_tile=None):
    """adj:[N,N], z_batch:[B,F], w1:[F,F], b1:[1,F], w2:[F,C], b2:[1,C]
    -> [B, N, C]  (one GCNGenerator forward per noise vector z)."""
    n_nodes = adj.shape[0]
    n_feat = w1.shape[0]
    n_classes = w2.shape[1]
    batch = z_batch.shape[0]

    if batch_tile is None:
        nb = _num_grid_blocks(batch)
        batch_tile = batch // nb
    else:
        assert batch % batch_tile == 0, "batch must be a multiple of batch_tile"
        nb = batch // batch_tile

    adj = adj.astype(jnp.float32)
    width = max(n_feat, n_classes)

    # Hoisted, grid-invariant precomputation (was in-kernel per step before).
    deg = jnp.sum(adj, axis=1, keepdims=True)                          # [N, 1]
    adj_bd = jnp.kron(jnp.eye(batch_tile, dtype=jnp.float32), adj)     # [bt*N, bt*N]

    # Pack parameters into one sublane-aligned slab -> single DMA, zero-cost views.
    b1_off = _align8(n_feat)
    w2_off = b1_off + 8
    b2_off = w2_off + _align8(n_feat)
    n_rows = b2_off + 8
    params = jnp.zeros((n_rows, width), dtype=jnp.float32)
    params = params.at[0:n_feat, 0:n_feat].set(w1.astype(jnp.float32))
    params = params.at[b1_off, 0:n_feat].set(b1.reshape(-1).astype(jnp.float32))
    params = params.at[w2_off:w2_off + n_feat, 0:n_classes].set(
        w2.astype(jnp.float32))
    params = params.at[b2_off, 0:n_classes].set(b2.reshape(-1).astype(jnp.float32))

    z3 = z_batch.astype(jnp.float32).reshape(nb, batch_tile, n_feat)

    # Advisory cost for the XLA scheduler.
    bn = batch_tile * n_nodes
    flops = int(nb * (2 * batch_tile * n_feat * n_feat
                      + 2 * bn * n_feat * n_classes
                      + 2 * bn * bn * n_classes))
    transcendentals = int(nb * bn * (n_classes + 1))
    bytes_accessed = int(4 * (adj_bd.size + deg.size + params.size + z3.size
                              + nb * bn * n_classes))

    out = pl.pallas_call(
        _gcn_generator_kernel,
        out_shape=jax.ShapeDtypeStruct(
            (nb, batch_tile, n_nodes, n_classes), jnp.float32),
        grid=(nb,),
        in_specs=[
            pl.BlockSpec((batch_tile * n_nodes, batch_tile * n_nodes),
                         lambda b: (0, 0)),                              # adj_bd
            pl.BlockSpec((n_nodes, 1), lambda b: (0, 0)),                # deg
            pl.BlockSpec(params.shape, lambda b: (0, 0)),                # params
            pl.BlockSpec((1, batch_tile, n_feat), lambda b: (b, 0, 0)),  # z
        ],
        out_specs=pl.BlockSpec((1, batch_tile, n_nodes, n_classes),
                               lambda b: (b, 0, 0, 0)),
        compiler_params=pltpu.CompilerParams(
            dimension_semantics=("parallel",)),
        cost_estimate=pl.CostEstimate(
            flops=flops,
            transcendentals=transcendentals,
            bytes_accessed=bytes_accessed),
    )(adj_bd, deg, params, z3)

    return out.reshape(batch, n_nodes, n_classes)


def gcn_generator_reference(adj, z_batch, w1, b1, w2, b2):
    """Pure-JAX reference using the original (unsimplified) formulation."""
    n_nodes = adj.shape[0]

    def one(zvec):
        x = jnp.broadcast_to(zvec[None, :], (n_nodes, zvec.shape[0]))
        h = jnp.maximum(adj @ (x @ w1) + b1, 0.0)
        s = adj @ (h @ w2) + b2
        return jax.nn.log_softmax(s, axis=1)

    return jax.vmap(one)(z_batch)


if __name__ == "__main__":
    key = jax.random.PRNGKey(0)
    k_adj, k_z, k_w1, k_b1, k_w2, k_b2 = jax.random.split(key, 6)

    N_NODES = 16      # number of RNA graph nodes
    N_FEATURES = 8    # n_features (== hidden_dim)
    N_CLASSES = 6     # GCN n_classes
    BATCH = 8         # generator forwards batched into one pallas_call

    # Symmetric, self-looped, row-normalized adjacency (typical GCN input).
    a = jax.random.uniform(k_adj, (N_NODES, N_NODES), dtype=jnp.float32)
    a = (a + a.T) * 0.5 + jnp.eye(N_NODES, dtype=jnp.float32)
    adj = a / jnp.sum(a, axis=1, keepdims=True)

    # Batched GAN noise inputs (one feature vector per generator call).
    z = jax.random.normal(k_z, (BATCH, N_FEATURES), dtype=jnp.float32)

    # Deterministic parameter init (uniform, pygcn-style scale).
    w1 = jax.random.uniform(k_w1, (N_FEATURES, N_FEATURES), dtype=jnp.float32,
                            minval=-0.5, maxval=0.5)
    b1 = jax.random.uniform(k_b1, (1, N_FEATURES), dtype=jnp.float32,
                            minval=-0.5, maxval=0.5)
    w2 = jax.random.uniform(k_w2, (N_FEATURES, N_CLASSES), dtype=jnp.float32,
                            minval=-0.5, maxval=0.5)
    b2 = jax.random.uniform(k_b2, (1, N_CLASSES), dtype=jnp.float32,
                            minval=-0.5, maxval=0.5)

    out = gcn_generator_forward(adj, z, w1, b1, w2, b2)
    out = jax.block_until_ready(out)

    ref = gcn_generator_reference(adj, z, w1, b1, w2, b2)
    assert out.shape == (BATCH, N_NODES, N_CLASSES)
    assert jnp.allclose(out, ref, atol=1e-4, rtol=1e-4)
    print("KERNEL_OK")
</pallas_src>

<mosaic_0001>
module attributes {stable_mosaic.version = 11 : i64} {
  func.func @_gcn_generator_kernel(%arg0: i32, %arg1: memref<128x128xf32, #tpu.memory_space<vmem>>, %arg2: memref<16x1xf32, #tpu.memory_space<vmem>>, %arg3: memref<32x8xf32, #tpu.memory_space<vmem>>, %arg4: memref<1x8x8xf32, #tpu.memory_space<vmem>>, %arg5: memref<1x8x16x6xf32, #tpu.memory_space<vmem>>) attributes {dimension_semantics = [#tpu.dimension_semantics<parallel>], iteration_bounds = array<i64: 1>, scalar_prefetch = 0 : i64, scratch_operands = 0 : i64, tpu.core_type = #tpu.core_type<tc>, window_params = [{pipeline_mode = #tpu.pipeline_mode<synchronous>, transform_indices = @transform_0, window_bounds = array<i64: 128, 128>}, {pipeline_mode = #tpu.pipeline_mode<synchronous>, transform_indices = @transform_1, window_bounds = array<i64: 16, 1>}, {pipeline_mode = #tpu.pipeline_mode<synchronous>, transform_indices = @transform_2, window_bounds = array<i64: 32, 8>}, {transform_indices = @transform_3, window_bounds = array<i64: 1, 8, 8>}, {transform_indices = @transform_4, window_bounds = array<i64: 1, 8, 16, 6>}]} {
    %c0 = arith.constant 0 : index
    %c0_0 = arith.constant 0 : index
    %0 = vector.load %arg3[%c0, %c0_0] : memref<32x8xf32, #tpu.memory_space<vmem>>, vector<8x8xf32>
    %c8 = arith.constant 8 : index
    %c0_1 = arith.constant 0 : index
    %1 = vector.load %arg3[%c8, %c0_1] : memref<32x8xf32, #tpu.memory_space<vmem>>, vector<1x8xf32>
    %c16 = arith.constant 16 : index
    %c0_2 = arith.constant 0 : index
    %2 = vector.load %arg3[%c16, %c0_2] : memref<32x8xf32, #tpu.memory_space<vmem>>, vector<8x6xf32>
    %c24 = arith.constant 24 : index
    %c0_3 = arith.constant 0 : index
    %3 = vector.load %arg3[%c24, %c0_3] : memref<32x8xf32, #tpu.memory_space<vmem>>, vector<1x6xf32>
    %c0_4 = arith.constant 0 : index
    %c0_5 = arith.constant 0 : index
    %4 = vector.load %arg2[%c0_4, %c0_5] : memref<16x1xf32, #tpu.memory_space<vmem>>, vector<16x1xf32>
    %c0_6 = arith.constant 0 : index
    %c0_7 = arith.constant 0 : index
    %c0_8 = arith.constant 0 : index
    %5 = vector.load %arg4[%c0_6, %c0_7, %c0_8] : memref<1x8x8xf32, #tpu.memory_space<vmem>>, vector<1x8x8xf32>
    %6 = vector.shape_cast %5 : vector<1x8x8xf32> to vector<8x8xf32>
    %cst = arith.constant dense<0.000000e+00> : vector<8x8xf32>
    %7 = tpu.matmul %6, %0, %cst {dimension_numbers = #tpu.dot_dimension_numbers<[1], [0], [0], [1], [0, 0, 1, 1], [], []>} : vector<8x8xf32>, vector<8x8xf32>, vector<8x8xf32> -> vector<8x8xf32>
    %8 = vector.shape_cast %4 : vector<16x1xf32> to vector<1x16x1xf32>
    %9 = vector.shape_cast %7 : vector<8x8xf32> to vector<8x1x8xf32>
    %10 = vector.broadcast %8 : vector<1x16x1xf32> to vector<8x16x8xf32>
    %11 = vector.broadcast %9 : vector<8x1x8xf32> to vector<8x16x8xf32>
    %12 = arith.mulf %10, %11 : vector<8x16x8xf32>
    %13 = vector.shape_cast %1 : vector<1x8xf32> to vector<1x1x8xf32>
    %14 = vector.broadcast %13 : vector<1x1x8xf32> to vector<8x16x8xf32>
    %15 = arith.addf %12, %14 : vector<8x16x8xf32>
    %cst_9 = arith.constant 0.000000e+00 : f32
    %16 = vector.broadcast %cst_9 : f32 to vector<8x16x8xf32>
    %17 = arith.maximumf %15, %16 : vector<8x16x8xf32>
    %18 = vector.shape_cast %17 : vector<8x16x8xf32> to vector<128x8xf32>
    %cst_10 = arith.constant dense<0.000000e+00> : vector<128x6xf32>
    %19 = tpu.matmul %18, %2, %cst_10 {dimension_numbers = #tpu.dot_dimension_numbers<[1], [0], [0], [1], [0, 0, 1, 1], [], []>} : vector<128x8xf32>, vector<8x6xf32>, vector<128x6xf32> -> vector<128x6xf32>
    %c0_11 = arith.constant 0 : index
    %c0_12 = arith.constant 0 : index
    %20 = vector.load %arg1[%c0_11, %c0_12] : memref<128x128xf32, #tpu.memory_space<vmem>>, vector<128x128xf32>
    %cst_13 = arith.constant dense<0.000000e+00> : vector<128x6xf32>
    %21 = tpu.matmul %20, %19, %cst_13 {dimension_numbers = #tpu.dot_dimension_numbers<[1], [0], [0], [1], [0, 0, 1, 1], [], []>} : vector<128x128xf32>, vector<128x6xf32>, vector<128x6xf32> -> vector<128x6xf32>
    %22 = vector.broadcast %3 : vector<1x6xf32> to vector<128x6xf32>
    %23 = arith.addf %21, %22 : vector<128x6xf32>
    %cst_14 = arith.constant dense<0xFF800000> : vector<128xf32>
    %24 = vector.multi_reduction <maximumf>, %23, %cst_14 [1] : vector<128x6xf32> to vector<128xf32>
    %25 = vector.shape_cast %24 : vector<128xf32> to vector<128x1xf32>
    %26 = vector.broadcast %25 : vector<128x1xf32> to vector<128x6xf32>
    %27 = arith.subf %23, %26 : vector<128x6xf32>
    %28 = math.exp %27 : vector<128x6xf32>
    %cst_15 = arith.constant dense<0.000000e+00> : vector<128xf32>
    %29 = vector.multi_reduction <add>, %28, %cst_15 [1] : vector<128x6xf32> to vector<128xf32>
    %30 = vector.shape_cast %29 : vector<128xf32> to vector<128x1xf32>
    %31 = math.log %30 : vector<128x1xf32>
    %32 = vector.broadcast %31 : vector<128x1xf32> to vector<128x6xf32>
    %33 = arith.subf %27, %32 : vector<128x6xf32>
    %34 = vector.shape_cast %33 : vector<128x6xf32> to vector<8x16x6xf32>
    %c0_16 = arith.constant 0 : index
    %c0_17 = arith.constant 0 : index
    %c0_18 = arith.constant 0 : index
    %c0_19 = arith.constant 0 : index
    %35 = vector.load %arg5[%c0_16, %c0_17, %c0_18, %c0_19] : memref<1x8x16x6xf32, #tpu.memory_space<vmem>>, vector<1x8x16x6xf32>
    %36 = vector.shape_cast %35 : vector<1x8x16x6xf32> to vector<8x16x6xf32>
    %37 = vector.shape_cast %34 : vector<8x16x6xf32> to vector<1x8x16x6xf32>
    tpu.vector_store %arg5[%c0_16, %c0_17, %c0_18, %c0_19], %37 {strides = array<i32>} : memref<1x8x16x6xf32, #tpu.memory_space<vmem>>, vector<1x8x16x6xf32>,
    return
  }
  func.func @transform_0(%arg0: i32) -> (i32, i32) {
    %c0_i32 = arith.constant 0 : i32
    %c0_i32_0 = arith.constant 0 : i32
    %c0_i32_1 = arith.constant 0 : i32
    return %c0_i32, %c0_i32_0 : i32, i32
  }
  func.func @transform_1(%arg0: i32) -> (i32, i32) {
    %c0_i32 = arith.constant 0 : i32
    %c0_i32_0 = arith.constant 0 : i32
    %c0_i32_1 = arith.constant 0 : i32
    return %c0_i32, %c0_i32_0 : i32, i32
  }
  func.func @transform_2(%arg0: i32) -> (i32, i32) {
    %c0_i32 = arith.constant 0 : i32
    %c0_i32_0 = arith.constant 0 : i32
    %c0_i32_1 = arith.constant 0 : i32
    return %c0_i32, %c0_i32_0 : i32, i32
  }
  func.func @transform_3(%arg0: i32) -> (i32, i32, i32) {
    %c0_i32 = arith.constant 0 : i32
    %c0_i32_0 = arith.constant 0 : i32
    %c0_i32_1 = arith.constant 0 : i32
    return %arg0, %c0_i32, %c0_i32_0 : i32, i32, i32
  }
  func.func @transform_4(%arg0: i32) -> (i32, i32, i32, i32) {
    %c0_i32 = arith.constant 0 : i32
    %c0_i32_0 = arith.constant 0 : i32
    %c0_i32_1 = arith.constant 0 : i32
    %c0_i32_2 = arith.constant 0 : i32
    return %arg0, %c0_i32, %c0_i32_0, %c0_i32_1 : i32, i32, i32, i32
  }
}

</mosaic_0001>

<llo_original>
// kernel: tpu_custom_call.1
$region0: #{tpu_custom_call.1}
  #allocation0 [shape = 'u32[]', space=smem, size = 0x4, offset = 0x4, fixed_abs, tag = 'smem constant byte address 0x4 - core index']
  #allocation1 [shape = 'u32[144,128]{1,0:T(1,128)}', space=vmem, size = 0x12000, scoped, tag = 'internal scratch']
  %s0 = inlined_call_operand.hbm [shape: f32[128,128], index: 0, kind: input, shape index: {}]
  %s1 = inlined_call_operand.vmem [shape: f32[16,1], index: 1, kind: input, shape index: {}]
  %s2 = inlined_call_operand.vmem [shape: f32[32,8], index: 2, kind: input, shape index: {}]
  %s3 = inlined_call_operand.vmem [shape: f32[1,8,8], index: 3, kind: input, shape index: {}]
  %s4 = inlined_call_operand.vmem [shape: f32[1,8,16,6], index: 4, kind: output, shape index: {}]
  %s5 = sld [smem:[#allocation0]]
  $region30: #{tpu_custom_call.1} parent=0
    _
  %s7 = ssub.s32 1, %s5
  %s8 = scalar_select 0, %s7, %s5
  $region1: #{tpu_custom_call.1} parent=0
    #allocation2 [shape = 'u8[65536]{0}', space=vmem, size = 0x10000, scoped, tag = 'input window, operand 0, single buffered']
    #allocation3 [shape = 's32[1]{0}', space=sflag, size = 0x4, scoped, tag = 'scoped memory for tpu_custom_call.1']
    %9 = vsyncpa [#allocation3], 0
    // Predicated region
    $region2: #{tpu_custom_call.1} parent=1 // pred_check
      _
    $region3: #{tpu_custom_call.1} parent=1 // pred_check_branch
      %11 = sbr.rel (0) target = $region5
    $region4: #{tpu_custom_call.1} parent=1 // pred_region
      %s13 = ssub.s32 2048, 2048
      %14 = vsyncadd [#allocation3], %s13
      %s15 = sshll.u32 [#allocation2], 4
      %s16 = int_to_ptr.vmem [resolvable:$true] %s15
      %21 = dma.hbm_to_vmem [thread:$0]  %s0, 2048, %s16, [#allocation3], 128, 128, 8
    $region5: #{tpu_custom_call.1} parent=1 // pred_fallthru
      _
    // Predicated region
    $region6: #{tpu_custom_call.1} parent=1 // pred_check
      _
    $region7: #{tpu_custom_call.1} parent=1 // pred_check_branch
      %23 = sbr.rel (0) target = $region9
    $region8: #{tpu_custom_call.1} parent=1 // pred_region
      _
    $region9: #{tpu_custom_call.1} parent=1 // pred_fallthru
      _
    // Predicated region
    $region10: #{tpu_custom_call.1} parent=1 // pred_check
      _
    $region11: #{tpu_custom_call.1} parent=1 // pred_check_branch
      %25 = sbr.rel (0) target = $region13
    $region12: #{tpu_custom_call.1} parent=1 // pred_region
      _
    $region13: #{tpu_custom_call.1} parent=1 // pred_fallthru
      _
    // Predicated region
    $region14: #{tpu_custom_call.1} parent=1 // pred_check
      _
    $region15: #{tpu_custom_call.1} parent=1 // pred_check_branch
      %27 = sbr.rel (0) target = $region17
    $region16: #{tpu_custom_call.1} parent=1 // pred_region
      _
    $region17: #{tpu_custom_call.1} parent=1 // pred_fallthru
      _
    // Predicated region
    $region18: #{tpu_custom_call.1} parent=1 // pred_check
      _
    $region19: #{tpu_custom_call.1} parent=1 // pred_check_branch
      %29 = sbr.rel (0) target = $region21
    $region20: #{tpu_custom_call.1} parent=1 // pred_region
      %30 = dma.done [#allocation3], 2048
    $region21: #{tpu_custom_call.1} parent=1 // pred_fallthru
      _
    %v31 = vld [vmem:[%s2] sm:$0xff]
    %v32 = vld [vmem:[%s2 + $0x8] sm:$0x1]
    %v33 = vld [vmem:[%s2 + $0x10] sm:$0xff]
    %v34 = vld [vmem:[%s2 + $0x18] sm:$0x1]
    %v35 = vld [vmem:[%s1] sm:$0xff]
    %v36 = vld [vmem:[%s1 + $0x8] sm:$0xff]
    %v37 = vld [vmem:[%s3] sm:$0xff]
    %vm38 = vcmask 64512
    %v40 = vsel %vm38, %v37, 0
    %42 = vmatprep.subr.mxu0 0.0
    %43 = vmatpush1.msra.mxu0 %v31
    %44 = vmatprep.subr.mxu0 0.0
    %45 = vmatpush1.msra.mxu0 0.0
    %46 = vmatprep.subr.mxu0 0.0
    %47 = vmatpush1.msra.mxu0 0.0
    %48 = vmatprep.subr.mxu0 0.0
    %49 = vmatpush1.msra.mxu0 0.0
    %50 = vmatprep.subr.mxu0 0.0
    %51 = vmatpush1.msra.mxu0 0.0
    %52 = vmatprep.subr.mxu0 0.0
    %53 = vmatpush1.msra.mxu0 0.0
    %54 = vmatprep.subr.mxu0 0.0
    %55 = vmatpush1.msra.mxu0 0.0
    %56 = vmatprep.subr.mxu0 0.0
    %57 = vmatpush1.msra.mxu0 0.0
    %58 = vmatprep.subr.mxu0 0.0
    %59 = vmatpush1.msra.mxu0 0.0
    %60 = vmatprep.subr.mxu0 0.0
    %61 = vmatpush1.msra.mxu0 0.0
    %62 = vmatprep.subr.mxu0 0.0
    %63 = vmatpush1.msra.mxu0 0.0
    %64 = vmatprep.subr.mxu0 0.0
    %65 = vmatpush1.msra.mxu0 0.0
    %66 = vmatprep.subr.mxu0 0.0
    %67 = vmatpush1.msra.mxu0 0.0
    %68 = vmatprep.subr.mxu0 0.0
    %69 = vmatpush1.msra.mxu0 0.0
    %70 = vmatprep.subr.mxu0 0.0
    %71 = vmatpush1.msra.mxu0 0.0
    %72 = vmatprep.subr.mxu0 0.0
    %73 = vmatpush1.msra.mxu0 0.0
    %74 = vmatprep.subr.mxu0 0.0
    %75 = vmatpush1.msra.mxu0 0.0
    %76 = vmatprep.subr.mxu0 0.0
    %77 = vmatpush1.msra.mxu0 0.0
    %78 = vmatprep.subr.mxu0 0.0
    %79 = vmatpush1.msra.mxu0 0.0
    %80 = vmatprep.subr.mxu0 0.0
    %81 = vmatpush1.msra.mxu0 0.0
    %82 = vmatprep.subr.mxu0 0.0
    %83 = vmatpush1.msra.mxu0 0.0
    %84 = vmatprep.subr.mxu0 0.0
    %85 = vmatpush1.msra.mxu0 0.0
    %86 = vmatprep.subr.mxu0 0.0
    %87 = vmatpush1.msra.mxu0 0.0
    %88 = vmatprep.subr.mxu0 0.0
    %89 = vmatpush1.msra.mxu0 0.0
    %90 = vmatprep.subr.mxu0 0.0
    %91 = vmatpush1.msra.mxu0 0.0
    %92 = vmatprep.subr.mxu0 0.0
    %93 = vmatpush1.msra.mxu0 0.0
    %94 = vmatprep.subr.mxu0 0.0
    %95 = vmatpush1.msra.mxu0 0.0
    %96 = vmatprep.subr.mxu0 0.0
    %97 = vmatpush1.msra.mxu0 0.0
    %98 = vmatprep.subr.mxu0 0.0
    %99 = vmatpush1.msra.mxu0 0.0
    %100 = vmatprep.subr.mxu0 0.0
    %101 = vmatpush1.msra.mxu0 0.0
    %102 = vmatprep.subr.mxu0 0.0
    %103 = vmatpush1.msra.mxu0 0.0
    %104 = vmatprep.subr.mxu0 0.0
    %105 = vmatpush1.msra.mxu0 0.0
    %106 = vmatprep.mubr.f32.mxu0 0.0
    %107 = vmatmul.mubr.f32.gmra.mrb[0].mxu0 %v40
    %v108 = vpop.f32.mrb[0].mxu0
    %v109 = vadd.f32 0.0, %v108
    %v110 = vpop.f32.mrb[0].mxu0
    %111 = vdwg.mxu0
    %v113 = vcombine.high %v109, %v109
    %v115 = vunpack.c.l.s4 1966171168
    %v116 = vunpack.c.0.s8 %v115
    %v117 = vlaneseq
    %v118 = vshrl.u32 %v117, 7
    %v119 = vsub.s32 %v116, %v118
    %v120 = vrot.slane %v109, %v119
    %v122 = vunpack.c.l.s4 1966171168
    %v123 = vunpack.c.0.s8 %v122
    %v124 = vlaneseq
    %v125 = vshrl.u32 %v124, 7
    %v126 = vsub.s32 %v123, %v125
    %v127 = vrot.slane %v113, %v126
    %v128 = vcombine.high %v120, %v120
    %v129 = vcombine.high %v127, %v127
    %v131 = vunpack.c.l.s4 1966171168
    %v132 = vunpack.c.0.s8 %v131
    %v133 = vlaneseq
    %v134 = vshrl.u32 %v133, 7
    %v135 = vsub.s32 %v132, %v134
    %v136 = vrot.slane %v120, %v135
    %v138 = vunpack.c.l.s4 1966171168
    %v139 = vunpack.c.0.s8 %v138
    %v140 = vlaneseq
    %v141 = vshrl.u32 %v140, 7
    %v142 = vsub.s32 %v139, %v141
    %v143 = vrot.slane %v127, %v142
    %v145 = vunpack.c.l.s4 1966171168
    %v146 = vunpack.c.0.s8 %v145
    %v147 = vlaneseq
    %v148 = vshrl.u32 %v147, 7
    %v149 = vsub.s32 %v146, %v148
    %v150 = vrot.slane %v128, %v149
    %v152 = vunpack.c.l.s4 1966171168
    %v153 = vunpack.c.0.s8 %v152
    %v154 = vlaneseq
    %v155 = vshrl.u32 %v154, 7
    %v156 = vsub.s32 %v153, %v155
    %v157 = vrot.slane %v129, %v156
    %v158 = vcombine.high %v136, %v136
    %v159 = vcombine.high %v143, %v143
    %v160 = vcombine.high %v150, %v150
    %v161 = vcombine.high %v157, %v157
    %163 = vset.pattern.permute.xlu0 0
    %164 = vperm.xlu0 %163, %v35
    %v165 = vpop.permute.xlu0 %164
    %168 = vset.pattern.permute.xlu0 0
    %169 = vperm.xlu0 %168, %v36
    %v170 = vpop.permute.xlu0 %169
    %v172 = vlaneseq
    %v173 = vshrl.u32 %v172, 7
    %v174 = vsub.s32 0, %v173
    %v175 = vrot.slane %v136, %v174
    %v176 = vlaneseq
    %v177 = vshrl.u32 %v176, 7
    %v178 = vsub.s32 0, %v177
    %v179 = vrot.slane %v150, %v178
    %v180 = vlaneseq
    %v181 = vshrl.u32 %v180, 7
    %v182 = vsub.s32 0, %v181
    %v183 = vrot.slane %v158, %v182
    %v184 = vlaneseq
    %v185 = vshrl.u32 %v184, 7
    %v186 = vsub.s32 0, %v185
    %v187 = vrot.slane %v160, %v186
    %v188 = vlaneseq
    %v189 = vshrl.u32 %v188, 7
    %v190 = vsub.s32 0, %v189
    %v191 = vrot.slane %v143, %v190
    %v192 = vlaneseq
    %v193 = vshrl.u32 %v192, 7
    %v194 = vsub.s32 0, %v193
    %v195 = vrot.slane %v157, %v194
    %v196 = vlaneseq
    %v197 = vshrl.u32 %v196, 7
    %v198 = vsub.s32 0, %v197
    %v199 = vrot.slane %v159, %v198
    %v200 = vlaneseq
    %v201 = vshrl.u32 %v200, 7
    %v202 = vsub.s32 0, %v201
    %v203 = vrot.slane %v161, %v202
    %v212 = vmul.f32 %v165, %v175
    %v213 = vmul.f32 %v170, %v175
    %v214 = vmul.f32 %v165, %v179
    %v215 = vmul.f32 %v170, %v179
    %v216 = vmul.f32 %v165, %v183
    %v217 = vmul.f32 %v170, %v183
    %v218 = vmul.f32 %v165, %v187
    %v219 = vmul.f32 %v170, %v187
    %v220 = vmul.f32 %v165, %v191
    %v221 = vmul.f32 %v170, %v191
    %v222 = vmul.f32 %v165, %v195
    %v223 = vmul.f32 %v170, %v195
    %v224 = vmul.f32 %v165, %v199
    %v225 = vmul.f32 %v170, %v199
    %v226 = vmul.f32 %v165, %v203
    %v227 = vmul.f32 %v170, %v203
    %v228 = vlaneseq
    %v229 = vshrl.u32 %v228, 7
    %v230 = vsub.s32 0, %v229
    %v231 = vrot.slane %v32, %v230
    %v232 = vadd.f32 %v212, %v231
    %v233 = vadd.f32 %v213, %v231
    %v234 = vadd.f32 %v214, %v231
    %v235 = vadd.f32 %v215, %v231
    %v236 = vadd.f32 %v216, %v231
    %v237 = vadd.f32 %v217, %v231
    %v238 = vadd.f32 %v218, %v231
    %v239 = vadd.f32 %v219, %v231
    %v240 = vadd.f32 %v220, %v231
    %v241 = vadd.f32 %v221, %v231
    %v242 = vadd.f32 %v222, %v231
    %v243 = vadd.f32 %v223, %v231
    %v244 = vadd.f32 %v224, %v231
    %v245 = vadd.f32 %v225, %v231
    %v246 = vadd.f32 %v226, %v231
    %v247 = vadd.f32 %v227, %v231
    %v248 = vmax.f32 %v232, 0.0
    %v249 = vmax.f32 %v233, 0.0
    %v250 = vmax.f32 %v234, 0.0
    %v251 = vmax.f32 %v235, 0.0
    %v252 = vmax.f32 %v236, 0.0
    %v253 = vmax.f32 %v237, 0.0
    %v254 = vmax.f32 %v238, 0.0
    %v255 = vmax.f32 %v239, 0.0
    %v256 = vmax.f32 %v240, 0.0
    %v257 = vmax.f32 %v241, 0.0
    %v258 = vmax.f32 %v242, 0.0
    %v259 = vmax.f32 %v243, 0.0
    %v260 = vmax.f32 %v244, 0.0
    %v261 = vmax.f32 %v245, 0.0
    %v262 = vmax.f32 %v246, 0.0
    %v263 = vmax.f32 %v247, 0.0
    %v265 = vsel %vm38, %v248, 0
    %v268 = vsel %vm38, %v249, 0
    %v271 = vsel %vm38, %v250, 0
    %v274 = vsel %vm38, %v251, 0
    %v277 = vsel %vm38, %v252, 0
    %v280 = vsel %vm38, %v253, 0
    %v283 = vsel %vm38, %v254, 0
    %v286 = vsel %vm38, %v255, 0
    %v289 = vsel %vm38, %v256, 0
    %v292 = vsel %vm38, %v257, 0
    %v295 = vsel %vm38, %v258, 0
    %v298 = vsel %vm38, %v259, 0
    %v301 = vsel %vm38, %v260, 0
    %v304 = vsel %vm38, %v261, 0
    %v307 = vsel %vm38, %v262, 0
    %v310 = vsel %vm38, %v263, 0
    %312 = vmatprep.subr.mxu0 0.0
    %313 = vmatpush1.msra.mxu0 %v33
    %314 = vmatprep.subr.mxu0 0.0
    %315 = vmatpush1.msra.mxu0 0.0
    %316 = vmatprep.subr.mxu0 0.0
    %317 = vmatpush1.msra.mxu0 0.0
    %318 = vmatprep.subr.mxu0 0.0
    %319 = vmatpush1.msra.mxu0 0.0
    %320 = vmatprep.subr.mxu0 0.0
    %321 = vmatpush1.msra.mxu0 0.0
    %322 = vmatprep.subr.mxu0 0.0
    %323 = vmatpush1.msra.mxu0 0.0
    %324 = vmatprep.subr.mxu0 0.0
    %325 = vmatpush1.msra.mxu0 0.0
    %326 = vmatprep.subr.mxu0 0.0
    %327 = vmatpush1.msra.mxu0 0.0
    %328 = vmatprep.subr.mxu0 0.0
    %329 = vmatpush1.msra.mxu0 0.0
    %330 = vmatprep.subr.mxu0 0.0
    %331 = vmatpush1.msra.mxu0 0.0
    %332 = vmatprep.subr.mxu0 0.0
    %333 = vmatpush1.msra.mxu0 0.0
    %334 = vmatprep.subr.mxu0 0.0
    %335 = vmatpush1.msra.mxu0 0.0
    %336 = vmatprep.subr.mxu0 0.0
    %337 = vmatpush1.msra.mxu0 0.0
    %338 = vmatprep.subr.mxu0 0.0
    %339 = vmatpush1.msra.mxu0 0.0
    %340 = vmatprep.subr.mxu0 0.0
    %341 = vmatpush1.msra.mxu0 0.0
    %342 = vmatprep.subr.mxu0 0.0
    %343 = vmatpush1.msra.mxu0 0.0
    %344 = vmatprep.subr.mxu0 0.0
    %345 = vmatpush1.msra.mxu0 0.0
    %346 = vmatprep.subr.mxu0 0.0
    %347 = vmatpush1.msra.mxu0 0.0
    %348 = vmatprep.subr.mxu0 0.0
    %349 = vmatpush1.msra.mxu0 0.0
    %350 = vmatprep.subr.mxu0 0.0
    %351 = vmatpush1.msra.mxu0 0.0
    %352 = vmatprep.subr.mxu0 0.0
    %353 = vmatpush1.msra.mxu0 0.0
    %354 = vmatprep.subr.mxu0 0.0
    %355 = vmatpush1.msra.mxu0 0.0
    %356 = vmatprep.subr.mxu0 0.0
    %357 = vmatpush1.msra.mxu0 0.0
    %358 = vmatprep.subr.mxu0 0.0
    %359 = vmatpush1.msra.mxu0 0.0
    %360 = vmatprep.subr.mxu0 0.0
    %361 = vmatpush1.msra.mxu0 0.0
    %362 = vmatprep.subr.mxu0 0.0
    %363 = vmatpush1.msra.mxu0 0.0
    %364 = vmatprep.subr.mxu0 0.0
    %365 = vmatpush1.msra.mxu0 0.0
    %366 = vmatprep.subr.mxu0 0.0
    %367 = vmatpush1.msra.mxu0 0.0
    %368 = vmatprep.subr.mxu0 0.0
    %369 = vmatpush1.msra.mxu0 0.0
    %370 = vmatprep.subr.mxu0 0.0
    %371 = vmatpush1.msra.mxu0 0.0
    %372 = vmatprep.subr.mxu0 0.0
    %373 = vmatpush1.msra.mxu0 0.0
    %374 = vmatprep.subr.mxu0 0.0
    %375 = vmatpush1.msra.mxu0 0.0
    %376 = vmatprep.mubr.f32.mxu0 0.0
    %377 = vmatmul.mubr.f32.gmra.mrb[0].mxu0 %v265
    %v378 = vpop.f32.mrb[0].mxu0
    %v379 = vadd.f32 0.0, %v378
    %v380 = vpop.f32.mrb[0].mxu0
    %381 = vmatprep.mubr.f32.mxu0 0.0
    %382 = vmatmul.mubr.f32.gmra.mrb[0].mxu0 %v268
    %v383 = vpop.f32.mrb[0].mxu0
    %v384 = vadd.f32 0.0, %v383
    %v385 = vpop.f32.mrb[0].mxu0
    %386 = vmatprep.mubr.f32.mxu0 0.0
    %387 = vmatmul.mubr.f32.gmra.mrb[0].mxu0 %v271
    %v388 = vpop.f32.mrb[0].mxu0
    %v389 = vadd.f32 0.0, %v388
    %v390 = vpop.f32.mrb[0].mxu0
    %391 = vmatprep.mubr.f32.mxu0 0.0
    %392 = vmatmul.mubr.f32.gmra.mrb[0].mxu0 %v274
    %v393 = vpop.f32.mrb[0].mxu0
    %v394 = vadd.f32 0.0, %v393
    %v395 = vpop.f32.mrb[0].mxu0
    %396 = vmatprep.mubr.f32.mxu0 0.0
    %397 = vmatmul.mubr.f32.gmra.mrb[0].mxu0 %v277
    %v398 = vpop.f32.mrb[0].mxu0
    %v399 = vadd.f32 0.0, %v398
    %v400 = vpop.f32.mrb[0].mxu0
    %401 = vmatprep.mubr.f32.mxu0 0.0
    %402 = vmatmul.mubr.f32.gmra.mrb[0].mxu0 %v280
    %v403 = vpop.f32.mrb[0].mxu0
    %v404 = vadd.f32 0.0, %v403
    %v405 = vpop.f32.mrb[0].mxu0
    %406 = vmatprep.mubr.f32.mxu0 0.0
    %407 = vmatmul.mubr.f32.gmra.mrb[0].mxu0 %v283
    %v408 = vpop.f32.mrb[0].mxu0
    %v409 = vadd.f32 0.0, %v408
    %v410 = vpop.f32.mrb[0].mxu0
    %411 = vmatprep.mubr.f32.mxu0 0.0
    %412 = vmatmul.mubr.f32.gmra.mrb[0].mxu0 %v286
    %v413 = vpop.f32.mrb[0].mxu0
    %v414 = vadd.f32 0.0, %v413
    %v415 = vpop.f32.mrb[0].mxu0
    %416 = vmatprep.mubr.f32.mxu0 0.0
    %417 = vmatmul.mubr.f32.gmra.mrb[0].mxu0 %v289
    %v418 = vpop.f32.mrb[0].mxu0
    %v419 = vadd.f32 0.0, %v418
    %v420 = vpop.f32.mrb[0].mxu0
    %421 = vmatprep.mubr.f32.mxu0 0.0
    %422 = vmatmul.mubr.f32.gmra.mrb[0].mxu0 %v292
    %v423 = vpop.f32.mrb[0].mxu0
    %v424 = vadd.f32 0.0, %v423
    %v425 = vpop.f32.mrb[0].mxu0
    %426 = vmatprep.mubr.f32.mxu0 0.0
    %427 = vmatmul.mubr.f32.gmra.mrb[0].mxu0 %v295
    %v428 = vpop.f32.mrb[0].mxu0
    %v429 = vadd.f32 0.0, %v428
    %v430 = vpop.f32.mrb[0].mxu0
    %431 = vmatprep.mubr.f32.mxu0 0.0
    %432 = vmatmul.mubr.f32.gmra.mrb[0].mxu0 %v298
    %v433 = vpop.f32.mrb[0].mxu0
    %v434 = vadd.f32 0.0, %v433
    %v435 = vpop.f32.mrb[0].mxu0
    %436 = vmatprep.mubr.f32.mxu0 0.0
    %437 = vmatmul.mubr.f32.gmra.mrb[0].mxu0 %v301
    %v438 = vpop.f32.mrb[0].mxu0
    %v439 = vadd.f32 0.0, %v438
    %v440 = vpop.f32.mrb[0].mxu0
    %441 = vmatprep.mubr.f32.mxu0 0.0
    %442 = vmatmul.mubr.f32.gmra.mrb[0].mxu0 %v304
    %v443 = vpop.f32.mrb[0].mxu0
    %v444 = vadd.f32 0.0, %v443
    %v445 = vpop.f32.mrb[0].mxu0
    %446 = vmatprep.mubr.f32.mxu0 0.0
    %447 = vmatmul.mubr.f32.gmra.mrb[0].mxu0 %v307
    %v448 = vpop.f32.mrb[0].mxu0
    %v449 = vadd.f32 0.0, %v448
    %v450 = vpop.f32.mrb[0].mxu0
    %451 = vmatprep.mubr.f32.mxu0 0.0
    %452 = vmatmul.mubr.f32.gmra.mrb[0].mxu0 %v310
    %v453 = vpop.f32.mrb[0].mxu0
    %v454 = vadd.f32 0.0, %v453
    %v455 = vpop.f32.mrb[0].mxu0
    %456 = vdwg.mxu0
    %v457 = vld [vmem:[#allocation2] sm:$0xff]
    %v458 = vld [vmem:[#allocation2 + $0x8] sm:$0xff]
    %v459 = vld [vmem:[#allocation2 + $0x10] sm:$0xff]
    %v460 = vld [vmem:[#allocation2 + $0x18] sm:$0xff]
    %v461 = vld [vmem:[#allocation2 + $0x20] sm:$0xff]
    %v462 = vld [vmem:[#allocation2 + $0x28] sm:$0xff]
    %v463 = vld [vmem:[#allocation2 + $0x30] sm:$0xff]
    %v464 = vld [vmem:[#allocation2 + $0x38] sm:$0xff]
    %v465 = vld [vmem:[#allocation2 + $0x40] sm:$0xff]
    %v466 = vld [vmem:[#allocation2 + $0x48] sm:$0xff]
    %v467 = vld [vmem:[#allocation2 + $0x50] sm:$0xff]
    %v468 = vld [vmem:[#allocation2 + $0x58] sm:$0xff]
    %v469 = vld [vmem:[#allocation2 + $0x60] sm:$0xff]
    %v470 = vld [vmem:[#allocation2 + $0x68] sm:$0xff]
    %v471 = vld [vmem:[#allocation2 + $0x70] sm:$0xff]
    %v472 = vld [vmem:[#allocation2 + $0x78] sm:$0xff]
    %v473 = vlaneseq
    %v474 = vshrl.u32 %v473, 7
    %v475 = vsub.s32 0, %v474
    %v476 = vrot.slane %v34, %v475
    %477 = vmatprep.subr.mxu0 0.0
    %478 = vmatpush1.msra.mxu0 %v379
    %479 = vmatprep.subr.mxu0 0.0
    %480 = vmatpush1.msra.mxu0 %v384
    %481 = vmatprep.subr.mxu0 0.0
    %482 = vmatpush1.msra.mxu0 %v389
    %483 = vmatprep.subr.mxu0 0.0
    %484 = vmatpush1.msra.mxu0 %v394
    %485 = vmatprep.subr.mxu0 0.0
    %486 = vmatpush1.msra.mxu0 %v399
    %487 = vmatprep.subr.mxu0 0.0
    %488 = vmatpush1.msra.mxu0 %v404
    %489 = vmatprep.subr.mxu0 0.0
    %490 = vmatpush1.msra.mxu0 %v409
    %491 = vmatprep.subr.mxu0 0.0
    %492 = vmatpush1.msra.mxu0 %v414
    %493 = vmatprep.subr.mxu0 0.0
    %494 = vmatpush1.msra.mxu0 %v419
    %495 = vmatprep.subr.mxu0 0.0
    %496 = vmatpush1.msra.mxu0 %v424
    %497 = vmatprep.subr.mxu0 0.0
    %498 = vmatpush1.msra.mxu0 %v429
    %499 = vmatprep.subr.mxu0 0.0
    %500 = vmatpush1.msra.mxu0 %v434
    %501 = vmatprep.subr.mxu0 0.0
    %502 = vmatpush1.msra.mxu0 %v439
    %503 = vmatprep.subr.mxu0 0.0
    %504 = vmatpush1.msra.mxu0 %v444
    %505 = vmatprep.subr.mxu0 0.0
    %506 = vmatpush1.msra.mxu0 %v449
    %507 = vmatprep.subr.mxu0 0.0
    %508 = vmatpush1.msra.mxu0 %v454
    %509 = vmatprep.subr.mxu0 0.0
    %510 = vmatpush1.msra.mxu0 0.0
    %511 = vmatprep.subr.mxu0 0.0
    %512 = vmatpush1.msra.mxu0 0.0
    %513 = vmatprep.subr.mxu0 0.0
    %514 = vmatpush1.msra.mxu0 0.0
    %515 = vmatprep.subr.mxu0 0.0
    %516 = vmatpush1.msra.mxu0 0.0
    %517 = vmatprep.subr.mxu0 0.0
    %518 = vmatpush1.msra.mxu0 0.0
    %519 = vmatprep.subr.mxu0 0.0
    %520 = vmatpush1.msra.mxu0 0.0
    %521 = vmatprep.subr.mxu0 0.0
    %522 = vmatpush1.msra.mxu0 0.0
    %523 = vmatprep.subr.mxu0 0.0
    %524 = vmatpush1.msra.mxu0 0.0
    %525 = vmatprep.subr.mxu0 0.0
    %526 = vmatpush1.msra.mxu0 0.0
    %527 = vmatprep.subr.mxu0 0.0
    %528 = vmatpush1.msra.mxu0 0.0
    %529 = vmatprep.subr.mxu0 0.0
    %530 = vmatpush1.msra.mxu0 0.0
    %531 = vmatprep.subr.mxu0 0.0
    %532 = vmatpush1.msra.mxu0 0.0
    %533 = vmatprep.subr.mxu0 0.0
    %534 = vmatpush1.msra.mxu0 0.0
    %535 = vmatprep.subr.mxu0 0.0
    %536 = vmatpush1.msra.mxu0 0.0
    %537 = vmatprep.subr.mxu0 0.0
    %538 = vmatpush1.msra.mxu0 0.0
    %539 = vmatprep.subr.mxu0 0.0
    %540 = vmatpush1.msra.mxu0 0.0
    %541 = vmatprep.mubr.f32.mxu0 0.0
    %542 = vmatmul.mubr.f32.gmra.mrb[0].mxu0 %v457
    %v543 = vpop.f32.mrb[0].mxu0
    %v544 = vadd.f32 %v476, %v543
    %v545 = vpop.f32.mrb[0].mxu0
    %546 = vmatprep.mubr.f32.mxu0 0.0
    %547 = vmatmul.mubr.f32.gmra.mrb[0].mxu0 %v458
    %v548 = vpop.f32.mrb[0].mxu0
    %v549 = vadd.f32 %v476, %v548
    %v550 = vpop.f32.mrb[0].mxu0
    %551 = vmatprep.mubr.f32.mxu0 0.0
    %552 = vmatmul.mubr.f32.gmra.mrb[0].mxu0 %v459
    %v553 = vpop.f32.mrb[0].mxu0
    %v554 = vadd.f32 %v476, %v553
    %v555 = vpop.f32.mrb[0].mxu0
    %556 = vmatprep.mubr.f32.mxu0 0.0
    %557 = vmatmul.mubr.f32.gmra.mrb[0].mxu0 %v460
    %v558 = vpop.f32.mrb[0].mxu0
    %v559 = vadd.f32 %v476, %v558
    %v560 = vpop.f32.mrb[0].mxu0
    %561 = vmatprep.mubr.f32.mxu0 0.0
    %562 = vmatmul.mubr.f32.gmra.mrb[0].mxu0 %v461
    %v563 = vpop.f32.mrb[0].mxu0
    %v564 = vadd.f32 %v476, %v563
    %v565 = vpop.f32.mrb[0].mxu0
    %566 = vmatprep.mubr.f32.mxu0 0.0
    %567 = vmatmul.mubr.f32.gmra.mrb[0].mxu0 %v462
    %v568 = vpop.f32.mrb[0].mxu0
    %v569 = vadd.f32 %v476, %v568
    %v570 = vpop.f32.mrb[0].mxu0
    %571 = vmatprep.mubr.f32.mxu0 0.0
    %572 = vmatmul.mubr.f32.gmra.mrb[0].mxu0 %v463
    %v573 = vpop.f32.mrb[0].mxu0
    %v574 = vadd.f32 %v476, %v573
    %v575 = vpop.f32.mrb[0].mxu0
    %576 = vmatprep.mubr.f32.mxu0 0.0
    %577 = vmatmul.mubr.f32.gmra.mrb[0].mxu0 %v464
    %v578 = vpop.f32.mrb[0].mxu0
    %v579 = vadd.f32 %v476, %v578
    %v580 = vpop.f32.mrb[0].mxu0
    %581 = vmatprep.mubr.f32.mxu0 0.0
    %582 = vmatmul.mubr.f32.gmra.mrb[0].mxu0 %v465
    %v583 = vpop.f32.mrb[0].mxu0
    %v584 = vadd.f32 %v476, %v583
    %v585 = vpop.f32.mrb[0].mxu0
    %586 = vmatprep.mubr.f32.mxu0 0.0
    %587 = vmatmul.mubr.f32.gmra.mrb[0].mxu0 %v466
    %v588 = vpop.f32.mrb[0].mxu0
    %v589 = vadd.f32 %v476, %v588
    %v590 = vpop.f32.mrb[0].mxu0
    %591 = vmatprep.mubr.f32.mxu0 0.0
    %592 = vmatmul.mubr.f32.gmra.mrb[0].mxu0 %v467
    %v593 = vpop.f32.mrb[0].mxu0
    %v594 = vadd.f32 %v476, %v593
    %v595 = vpop.f32.mrb[0].mxu0
    %596 = vmatprep.mubr.f32.mxu0 0.0
    %597 = vmatmul.mubr.f32.gmra.mrb[0].mxu0 %v468
    %v598 = vpop.f32.mrb[0].mxu0
    %v599 = vadd.f32 %v476, %v598
    %v600 = vpop.f32.mrb[0].mxu0
    %601 = vmatprep.mubr.f32.mxu0 0.0
    %602 = vmatmul.mubr.f32.gmra.mrb[0].mxu0 %v469
    %v603 = vpop.f32.mrb[0].mxu0
    %v604 = vadd.f32 %v476, %v603
    %v605 = vpop.f32.mrb[0].mxu0
    %606 = vmatprep.mubr.f32.mxu0 0.0
    %607 = vmatmul.mubr.f32.gmra.mrb[0].mxu0 %v470
    %v608 = vpop.f32.mrb[0].mxu0
    %v609 = vadd.f32 %v476, %v608
    %v610 = vpop.f32.mrb[0].mxu0
    %611 = vmatprep.mubr.f32.mxu0 0.0
    %612 = vmatmul.mubr.f32.gmra.mrb[0].mxu0 %v471
    %v613 = vpop.f32.mrb[0].mxu0
    %v614 = vadd.f32 %v476, %v613
    %v615 = vpop.f32.mrb[0].mxu0
    %616 = vmatprep.mubr.f32.mxu0 0.0
    %617 = vmatmul.mubr.f32.gmra.mrb[0].mxu0 %v472
    %v618 = vpop.f32.mrb[0].mxu0
    %v619 = vadd.f32 %v476, %v618
    %v620 = vpop.f32.mrb[0].mxu0
    %621 = vdwg.mxu0
    %vm622 = vcmask 48128
    %v623 = vsel %vm622, %v544, -inf
    %624 = vmax.xlane.f32.xlu0 %v623
    %v625 = vpop.xlane.xlu0 %624
    %v626 = vsel %vm622, %v549, -inf
    %627 = vmax.xlane.f32.xlu0 %v626
    %v628 = vpop.xlane.xlu0 %627
    %v629 = vsel %vm622, %v554, -inf
    %630 = vmax.xlane.f32.xlu0 %v629
    %v631 = vpop.xlane.xlu0 %630
    %v632 = vsel %vm622, %v559, -inf
    %633 = vmax.xlane.f32.xlu0 %v632
    %v634 = vpop.xlane.xlu0 %633
    %v635 = vsel %vm622, %v564, -inf
    %636 = vmax.xlane.f32.xlu0 %v635
    %v637 = vpop.xlane.xlu0 %636
    %v638 = vsel %vm622, %v569, -inf
    %639 = vmax.xlane.f32.xlu0 %v638
    %v640 = vpop.xlane.xlu0 %639
    %v641 = vsel %vm622, %v574, -inf
    %642 = vmax.xlane.f32.xlu0 %v641
    %v643 = vpop.xlane.xlu0 %642
    %v644 = vsel %vm622, %v579, -inf
    %645 = vmax.xlane.f32.xlu0 %v644
    %v646 = vpop.xlane.xlu0 %645
    %v647 = vsel %vm622, %v584, -inf
    %648 = vmax.xlane.f32.xlu0 %v647
    %v649 = vpop.xlane.xlu0 %648
    %v650 = vsel %vm622, %v589, -inf
    %651 = vmax.xlane.f32.xlu0 %v650
    %v652 = vpop.xlane.xlu0 %651
    %v653 = vsel %vm622, %v594, -inf
    %654 = vmax.xlane.f32.xlu0 %v653
    %v655 = vpop.xlane.xlu0 %654
    %v656 = vsel %vm622, %v599, -inf
    %657 = vmax.xlane.f32.xlu0 %v656
    %v658 = vpop.xlane.xlu0 %657
    %v659 = vsel %vm622, %v604, -inf
    %660 = vmax.xlane.f32.xlu0 %v659
    %v661 = vpop.xlane.xlu0 %660
    %v662 = vsel %vm622, %v609, -inf
    %663 = vmax.xlane.f32.xlu0 %v662
    %v664 = vpop.xlane.xlu0 %663
    %v665 = vsel %vm622, %v614, -inf
    %666 = vmax.xlane.f32.xlu0 %v665
    %v667 = vpop.xlane.xlu0 %666
    %v668 = vsel %vm622, %v619, -inf
    %669 = vmax.xlane.f32.xlu0 %v668
    %v670 = vpop.xlane.xlu0 %669
    %v671 = vsub.f32 %v544, %v625
    %v672 = vsub.f32 %v549, %v628
    %v673 = vsub.f32 %v554, %v631
    %v674 = vsub.f32 %v559, %v634
    %v675 = vsub.f32 %v564, %v637
    %v676 = vsub.f32 %v569, %v640
    %v677 = vsub.f32 %v574, %v643
    %v678 = vsub.f32 %v579, %v646
    %v679 = vsub.f32 %v584, %v649
    %v680 = vsub.f32 %v589, %v652
    %v681 = vsub.f32 %v594, %v655
    %v682 = vsub.f32 %v599, %v658
    %v683 = vsub.f32 %v604, %v661
    %v684 = vsub.f32 %v609, %v664
    %v685 = vsub.f32 %v614, %v667
    %v686 = vsub.f32 %v619, %v670
    %v687 = vmul.f32 %v671, 1.442695
    %v688 = vpow.pop %v687
    %v689 = vmul.f32 %v672, 1.442695
    %v690 = vpow.pop %v689
    %v691 = vmul.f32 %v673, 1.442695
    %v692 = vpow.pop %v691
    %v693 = vmul.f32 %v674, 1.442695
    %v694 = vpow.pop %v693
    %v695 = vmul.f32 %v675, 1.442695
    %v696 = vpow.pop %v695
    %v697 = vmul.f32 %v676, 1.442695
    %v698 = vpow.pop %v697
    %v699 = vmul.f32 %v677, 1.442695
    %v700 = vpow.pop %v699
    %v701 = vmul.f32 %v678, 1.442695
    %v702 = vpow.pop %v701
    %v703 = vmul.f32 %v679, 1.442695
    %v704 = vpow.pop %v703
    %v705 = vmul.f32 %v680, 1.442695
    %v706 = vpow.pop %v705
    %v707 = vmul.f32 %v681, 1.442695
    %v708 = vpow.pop %v707
    %v709 = vmul.f32 %v682, 1.442695
    %v710 = vpow.pop %v709
    %v711 = vmul.f32 %v683, 1.442695
    %v712 = vpow.pop %v711
    %v713 = vmul.f32 %v684, 1.442695
    %v714 = vpow.pop %v713
    %v715 = vmul.f32 %v685, 1.442695
    %v716 = vpow.pop %v715
    %v717 = vmul.f32 %v686, 1.442695
    %v718 = vpow.pop %v717
    %v719 = vsel %vm622, %v688, 0.0
    %720 = vadd.xlane.f32.xlu0 %v719
    %v721 = vpop.xlane.xlu0 %720
    %v722 = vsel %vm622, %v690, 0.0
    %723 = vadd.xlane.f32.xlu0 %v722
    %v724 = vpop.xlane.xlu0 %723
    %v725 = vsel %vm622, %v692, 0.0
    %726 = vadd.xlane.f32.xlu0 %v725
    %v727 = vpop.xlane.xlu0 %726
    %v728 = vsel %vm622, %v694, 0.0
    %729 = vadd.xlane.f32.xlu0 %v728
    %v730 = vpop.xlane.xlu0 %729
    %v731 = vsel %vm622, %v696, 0.0
    %732 = vadd.xlane.f32.xlu0 %v731
    %v733 = vpop.xlane.xlu0 %732
    %v734 = vsel %vm622, %v698, 0.0
    %735 = vadd.xlane.f32.xlu0 %v734
    %v736 = vpop.xlane.xlu0 %735
    %v737 = vsel %vm622, %v700, 0.0
    %738 = vadd.xlane.f32.xlu0 %v737
    %v739 = vpop.xlane.xlu0 %738
    %v740 = vsel %vm622, %v702, 0.0
    %741 = vadd.xlane.f32.xlu0 %v740
    %v742 = vpop.xlane.xlu0 %741
    %v743 = vsel %vm622, %v704, 0.0
    %744 = vadd.xlane.f32.xlu0 %v743
    %v745 = vpop.xlane.xlu0 %744
    %v746 = vsel %vm622, %v706, 0.0
    %747 = vadd.xlane.f32.xlu0 %v746
    %v748 = vpop.xlane.xlu0 %747
    %v749 = vsel %vm622, %v708, 0.0
    %750 = vadd.xlane.f32.xlu0 %v749
    %v751 = vpop.xlane.xlu0 %750
    %v752 = vsel %vm622, %v710, 0.0
    %753 = vadd.xlane.f32.xlu0 %v752
    %v754 = vpop.xlane.xlu0 %753
    %v755 = vsel %vm622, %v712, 0.0
    %756 = vadd.xlane.f32.xlu0 %v755
    %v757 = vpop.xlane.xlu0 %756
    %v758 = vsel %vm622, %v714, 0.0
    %759 = vadd.xlane.f32.xlu0 %v758
    %v760 = vpop.xlane.xlu0 %759
    %v761 = vsel %vm622, %v716, 0.0
    %762 = vadd.xlane.f32.xlu0 %v761
    %v763 = vpop.xlane.xlu0 %762
    %v764 = vsel %vm622, %v718, 0.0
    %765 = vadd.xlane.f32.xlu0 %v764
    %v766 = vpop.xlane.xlu0 %765
    %v767 = vlog2.pop %v721
    %v768 = vmul.f32 %v767, 0.6931472
    %v769 = vlog2.pop %v724
    %v770 = vmul.f32 %v769, 0.6931472
    %v771 = vlog2.pop %v727
    %v772 = vmul.f32 %v771, 0.6931472
    %v773 = vlog2.pop %v730
    %v774 = vmul.f32 %v773, 0.6931472
    %v775 = vlog2.pop %v733
    %v776 = vmul.f32 %v775, 0.6931472
    %v777 = vlog2.pop %v736
    %v778 = vmul.f32 %v777, 0.6931472
    %v779 = vlog2.pop %v739
    %v780 = vmul.f32 %v779, 0.6931472
    %v781 = vlog2.pop %v742
    %v782 = vmul.f32 %v781, 0.6931472
    %v783 = vlog2.pop %v745
    %v784 = vmul.f32 %v783, 0.6931472
    %v785 = vlog2.pop %v748
    %v786 = vmul.f32 %v785, 0.6931472
    %v787 = vlog2.pop %v751
    %v788 = vmul.f32 %v787, 0.6931472
    %v789 = vlog2.pop %v754
    %v790 = vmul.f32 %v789, 0.6931472
    %v791 = vlog2.pop %v757
    %v792 = vmul.f32 %v791, 0.6931472
    %v793 = vlog2.pop %v760
    %v794 = vmul.f32 %v793, 0.6931472
    %v795 = vlog2.pop %v763
    %v796 = vmul.f32 %v795, 0.6931472
    %v797 = vlog2.pop %v766
    %v798 = vmul.f32 %v797, 0.6931472
    %v799 = vsub.f32 %v671, %v768
    %v800 = vsub.f32 %v672, %v770
    %v801 = vsub.f32 %v673, %v772
    %v802 = vsub.f32 %v674, %v774
    %v803 = vsub.f32 %v675, %v776
    %v804 = vsub.f32 %v676, %v778
    %v805 = vsub.f32 %v677, %v780
    %v806 = vsub.f32 %v678, %v782
    %v807 = vsub.f32 %v679, %v784
    %v808 = vsub.f32 %v680, %v786
    %v809 = vsub.f32 %v681, %v788
    %v810 = vsub.f32 %v682, %v790
    %v811 = vsub.f32 %v683, %v792
    %v812 = vsub.f32 %v684, %v794
    %v813 = vsub.f32 %v685, %v796
    %v814 = vsub.f32 %v686, %v798
    %815 = vst.msk [vmem:[%s4] sm:$0xff] %vm622, %v799
    %816 = vst.msk [vmem:[%s4 + $0x8] sm:$0xff] %vm622, %v800
    %817 = vst.msk [vmem:[%s4 + $0x10] sm:$0xff] %vm622, %v801
    %818 = vst.msk [vmem:[%s4 + $0x18] sm:$0xff] %vm622, %v802
    %819 = vst.msk [vmem:[%s4 + $0x20] sm:$0xff] %vm622, %v803
    %820 = vst.msk [vmem:[%s4 + $0x28] sm:$0xff] %vm622, %v804
    %821 = vst.msk [vmem:[%s4 + $0x30] sm:$0xff] %vm622, %v805
    %822 = vst.msk [vmem:[%s4 + $0x38] sm:$0xff] %vm622, %v806
    %823 = vst.msk [vmem:[%s4 + $0x40] sm:$0xff] %vm622, %v807
    %824 = vst.msk [vmem:[%s4 + $0x48] sm:$0xff] %vm622, %v808
    %825 = vst.msk [vmem:[%s4 + $0x50] sm:$0xff] %vm622, %v809
    %826 = vst.msk [vmem:[%s4 + $0x58] sm:$0xff] %vm622, %v810
    %827 = vst.msk [vmem:[%s4 + $0x60] sm:$0xff] %vm622, %v811
    %828 = vst.msk [vmem:[%s4 + $0x68] sm:$0xff] %vm622, %v812
    %829 = vst.msk [vmem:[%s4 + $0x70] sm:$0xff] %vm622, %v813
    %830 = vst.msk [vmem:[%s4 + $0x78] sm:$0xff] %vm622, %v814
    // Predicated region
    $region22: #{tpu_custom_call.1} parent=1 // pred_check
      _
    $region23: #{tpu_custom_call.1} parent=1 // pred_check_branch
      %832 = sbr.rel (0) target = $region25
    $region24: #{tpu_custom_call.1} parent=1 // pred_region
      _
    $region25: #{tpu_custom_call.1} parent=1 // pred_fallthru
      _
    // Predicated region
    $region26: #{tpu_custom_call.1} parent=1 // pred_check
      _
    $region27: #{tpu_custom_call.1} parent=1 // pred_check_branch
      %834 = sbr.rel (0) target = $region29
    $region28: #{tpu_custom_call.1} parent=1 // pred_region
      _
    $region29: #{tpu_custom_call.1} parent=1 // pred_fallthru
      _
    %835 = vsyncpa [#allocation3], 1

</llo_original>
